<compile_context>
chip_gen: v5e
topology: v5e:2x2
jax: 0.10.0
libtpu: 0.0.40
codegen_flags: <defaults>
</compile_context>

<pallas_src>
import functools

import jax
import jax.numpy as jnp
from jax.experimental import pallas as pl
from jax.experimental.pallas import tpu as pltpu

EPS = 1e-5  # torch.nn.LayerNorm default eps


def _layernorm(x, gamma, beta):
    mean = jnp.mean(x, axis=-1, keepdims=True)
    var = jnp.mean((x - mean) ** 2, axis=-1, keepdims=True)
    return (x - mean) * jax.lax.rsqrt(var + EPS) * gamma + beta


def _gelu_exact(x):
    return 0.5 * x * (1.0 + jax.lax.erf(x * 0.7071067811865476))


def _vmem_capacity_bytes():
    """Physical VMEM per core (128 MiB on v5e/v6e, 64 MiB on v7x)."""
    try:
        info = pltpu.get_tpu_info()
        cap = getattr(info, "vmem_capacity_bytes", None)
        if cap:
            return int(cap)
    except Exception:
        pass
    return 128 << 20


def _vmem_budget(est_bytes, *, headroom=1.4):
    """Generation-aware scoped-VMEM limit: use most of the chip, leave compiler headroom."""
    cap = _vmem_capacity_bytes()
    usable = int(cap * 0.78)                       # ~100 MiB on v5e/v6e, ~50 MiB on v7x
    floor = (32 << 20) if cap >= (96 << 20) else (24 << 20)
    return int(min(max(est_bytes * headroom, floor), usable))


def _pick_head_group(num_heads, head_dim, lane_target=256):
    """Smallest divisor G of num_heads with G*head_dim >= lane_target (MXU width)."""
    for g in range(1, num_heads + 1):
        if num_heads % g == 0 and g * head_dim >= lane_target:
            return g
    return num_heads


def _pick_token_tile(n, target):
    """Largest multiple of 8 <= target dividing n; else whole sequence."""
    if n <= target:
        return n
    for t in range(target, 7, -8):
        if n % t == 0:
            return t
    return n


# ------------------------- Pallas kernels -------------------------

def attn_group_kernel(x_ref, g1_ref, b1_ref, wqkv_ref, wproj_ref, bproj_ref,
                      o_ref, y_ref, qkv_ref, ho_ref, acc_ref, *, group, head_dim):
    """Grid point (b, g): accumulate head-group g's contribution to
    out[b] = x + proj(MHSA(LN(x)))."""
    g = pl.program_id(1)
    ghd = group * head_dim

    @pl.when(g == 0)
    def _init():
        x = x_ref[0]                                               # (N, D) f32
        y_ref[...] = _layernorm(x, g1_ref[...], b1_ref[...]).astype(y_ref.dtype)
        acc_ref[...] = x + bproj_ref[...]                          # residual + proj bias

    y = y_ref[...]                                                 # (N, D) bf16
    # One wide QKV GEMM for the whole group (scale already folded into Wq).
    qkv_ref[...] = jnp.dot(y, wqkv_ref[0],
                           preferred_element_type=jnp.float32).astype(qkv_ref.dtype)

    # Per-head attention: static slices of the bf16 QKV scratch; only one (N, N)
    # score matrix is live at a time (each head's temps die at the ho store).
    for h in range(group):
        lo = h * head_dim
        hi = lo + head_dim
        q = qkv_ref[:, lo:hi]                                      # (N, hd) bf16
        k = qkv_ref[:, ghd + lo:ghd + hi]
        v = qkv_ref[:, 2 * ghd + lo:2 * ghd + hi]
        s = jnp.einsum("qd,kd->qk", q, k,
                       preferred_element_type=jnp.float32)         # (N, N) f32
        s = s - jnp.max(s, axis=-1, keepdims=True)
        p = jnp.exp(s)
        p = p * pl.reciprocal(jnp.sum(p, axis=-1, keepdims=True), approx=True)
        ho_ref[:, lo:hi] = jnp.dot(p.astype(jnp.bfloat16), v,
                                   preferred_element_type=jnp.float32
                                   ).astype(ho_ref.dtype)          # (N, hd)

    # Group projection: one (N, G*hd) @ (G*hd, D) GEMM into the f32 accumulator.
    acc_ref[...] += jnp.dot(ho_ref[...], wproj_ref[0],
                            preferred_element_type=jnp.float32)

    @pl.when(g == pl.num_programs(1) - 1)
    def _finalize():
        o_ref[0] = acc_ref[...].astype(o_ref.dtype)


def mlp_residual_kernel(x_ref, g2_ref, beta2_ref, w1_ref, bias1_ref,
                        w2_ref, bias2_ref, o_ref):
    """Grid point (b, t): out tile = x tile + fc2(gelu(fc1(LN(x tile))))."""
    x = x_ref[0]                                                   # (TN, D) f32
    y = _layernorm(x, g2_ref[...], beta2_ref[...])
    h = jnp.dot(y.astype(jnp.bfloat16), w1_ref[...],
                preferred_element_type=jnp.float32) + bias1_ref[...]
    h = _gelu_exact(h)
    o = jnp.dot(h.astype(jnp.bfloat16), w2_ref[...],
                preferred_element_type=jnp.float32) + bias2_ref[...]
    o_ref[0] = x + o


# ------------------------- host-side parameter prep -------------------------

def prepare_params(raw, *, num_heads, lane_target=256):
    """Merge Wq|Wk|Wv per head-group, fold softmax scale into Wq, cast to bf16."""
    D = raw["wqkv"].shape[0]
    assert D % num_heads == 0
    hd = D // num_heads
    G = _pick_head_group(num_heads, hd, lane_target)
    HG = num_heads // G
    ghd = G * hd
    scale = hd ** -0.5

    wq = raw["wqkv"][:, 0:D] * scale        # fold softmax scale (one-time host prep)
    wk = raw["wqkv"][:, D:2 * D]
    wv = raw["wqkv"][:, 2 * D:3 * D]

    def grp(w):                              # (D, D) -> (HG, D, G*hd), heads contiguous
        return w.reshape(D, HG, ghd).transpose(1, 0, 2)

    wqkv_g = jnp.concatenate([grp(wq), grp(wk), grp(wv)], axis=-1)   # (HG, D, 3*G*hd)

    return {
        "gamma1": raw["gamma1"], "beta1": raw["beta1"],
        "wqkv_g": wqkv_g.astype(jnp.bfloat16),
        "wproj_g": raw["wproj"].reshape(HG, ghd, D).astype(jnp.bfloat16),
        "bproj": raw["bproj"],
        "gamma2": raw["gamma2"], "beta2": raw["beta2"],
        "w1": raw["w1"].astype(jnp.bfloat16), "b1": raw["b1"],
        "w2": raw["w2"].astype(jnp.bfloat16), "b2": raw["b2"],
    }


# ------------------------- wrapper -------------------------

def block_forward(x, p, *, num_heads, mlp_token_tile=None):
    B, N, D = x.shape
    hd = D // num_heads
    HG, _, c3 = p["wqkv_g"].shape
    ghd = c3 // 3
    G = ghd // hd
    Hdim = p["w1"].shape[1]

    # ---------------- attention + residual: grid = (batch, head-group) ----------------
    x_spec = pl.BlockSpec((1, N, D), lambda b, g: (b, 0, 0))
    vec_spec = lambda d: pl.BlockSpec((1, d), lambda b, g: (0, 0))

    attn_est = (
        2 * 2 * N * D * 4                    # x / out blocks, double-buffered, f32
        + N * D * (2 + 4)                    # y scratch (bf16) + acc scratch (f32)
        + N * 3 * ghd * 2 + N * ghd * 2      # qkv + head-output scratches (bf16)
        + 2 * (D * 3 * ghd + ghd * D) * 2    # per-group weights, bf16, double-buffered
        + N * N * (4 + 2)                    # one head's scores f32 + probs bf16
        + N * 3 * ghd * 4                    # f32 QKV GEMM result before cast
    )

    attn_fn = pl.pallas_call(
        functools.partial(attn_group_kernel, group=G, head_dim=hd),
        out_shape=jax.ShapeDtypeStruct((B, N, D), x.dtype),
        grid=(B, HG),
        in_specs=[
            x_spec,
            vec_spec(D), vec_spec(D),                             # gamma1, beta1
            pl.BlockSpec((1, D, 3 * ghd), lambda b, g: (g, 0, 0)),  # merged QKV per group
            pl.BlockSpec((1, ghd, D), lambda b, g: (g, 0, 0)),      # Wproj rows per group
            vec_spec(D),                                          # bproj
        ],
        out_specs=x_spec,
        scratch_shapes=[
            pltpu.VMEM((N, D), jnp.bfloat16),        # LN(x), reused across groups
            pltpu.VMEM((N, 3 * ghd), jnp.bfloat16),  # group QKV
            pltpu.VMEM((N, ghd), jnp.bfloat16),      # concatenated head outputs
            pltpu.VMEM((N, D), jnp.float32),         # f32 residual accumulator
        ],
        compiler_params=pltpu.CompilerParams(
            dimension_semantics=("parallel", "arbitrary"),
            vmem_limit_bytes=_vmem_budget(attn_est)),
    )
    x = attn_fn(x, p["gamma1"], p["beta1"], p["wqkv_g"], p["wproj_g"], p["bproj"])

    # ---------------- MLP + residual: grid = (batch, token tile) ----------------
    cap = _vmem_capacity_bytes()
    if mlp_token_tile is None:
        mlp_token_tile = 256 if cap >= (96 << 20) else 128   # smaller tiles on v7x
    TN = _pick_token_tile(N, mlp_token_tile)
    NT = N // TN

    xt_spec = pl.BlockSpec((1, TN, D), lambda b, t: (b, t, 0))
    vec2 = lambda d: pl.BlockSpec((1, d), lambda b, t: (0, 0))

    mlp_est = (
        2 * 2 * TN * D * 4           # x / out tiles, double-buffered, f32
        + (D * Hdim + Hdim * D) * 2  # fc1 + fc2 weights, bf16, SINGLE-buffered
        + TN * Hdim * (4 + 2)        # hidden f32 + bf16 copy
        + TN * D * 4                 # LN output
    )

    def build_mlp(single_buffer_weights):
        if single_buffer_weights:
            # Grid-invariant weights: single-buffer them (no prefetch needed, half the VMEM).
            mat2 = lambda r, c: pl.BlockSpec((r, c), lambda b, t: (0, 0),
                                             pipeline_mode=pl.Buffered(1))
        else:
            mat2 = lambda r, c: pl.BlockSpec((r, c), lambda b, t: (0, 0))
        return pl.pallas_call(
            mlp_residual_kernel,
            out_shape=jax.ShapeDtypeStruct((B, N, D), x.dtype),
            grid=(B, NT),
            in_specs=[
                xt_spec,
                vec2(D), vec2(D),                      # gamma2, beta2
                mat2(D, Hdim), vec2(Hdim),             # fc1
                mat2(Hdim, D), vec2(D),                # fc2
            ],
            out_specs=xt_spec,
            compiler_params=pltpu.CompilerParams(
                dimension_semantics=("parallel", "parallel"),
                vmem_limit_bytes=_vmem_budget(mlp_est)),
        )

    mlp_args = (x, p["gamma2"], p["beta2"], p["w1"], p["b1"], p["w2"], p["b2"])
    try:
        x = build_mlp(True)(*mlp_args)
    except Exception:
        # TODO(synk): pl.Buffered(1) rejected by this jax version; fall back to
        # default double-buffered weights (correct, just more VMEM).
        x = build_mlp(False)(*mlp_args)
    return x


# ------------------------- pure-JAX reference (bf16-matched) -------------------------

def block_reference(x, p, *, head_dim):
    bf = jnp.bfloat16
    HG, D, c3 = p["wqkv_g"].shape
    ghd = c3 // 3
    G = ghd // head_dim

    y = _layernorm(x, p["gamma1"], p["beta1"]).astype(bf)
    qkv = jnp.einsum("bnd,gdc->bgnc", y, p["wqkv_g"],
                     preferred_element_type=jnp.float32).astype(bf)   # (B,HG,N,3*ghd)

    def split_heads(a):                     # (B, HG, N, ghd) -> (B, HG, G, N, hd)
        B_, _, N_, _ = a.shape
        return a.reshape(B_, HG, N_, G, head_dim).transpose(0, 1, 3, 2, 4)

    q = split_heads(qkv[..., 0:ghd])        # scale already folded into Wq
    k = split_heads(qkv[..., ghd:2 * ghd])
    v = split_heads(qkv[..., 2 * ghd:3 * ghd])

    s = jnp.einsum("bghqe,bghke->bghqk", q, k, preferred_element_type=jnp.float32)
    s = s - jnp.max(s, axis=-1, keepdims=True)
    pr = jnp.exp(s)
    pr = pr / jnp.sum(pr, axis=-1, keepdims=True)
    ho = jnp.einsum("bghqk,bghke->bghqe", pr.astype(bf), v,
                    preferred_element_type=jnp.float32)               # (B,HG,G,N,hd)
    B_, _, _, N_, _ = ho.shape
    ho = ho.transpose(0, 1, 3, 2, 4).reshape(B_, HG, N_, ghd).astype(bf)
    attn = jnp.einsum("bgnc,gcd->bnd", ho, p["wproj_g"],
                      preferred_element_type=jnp.float32)
    x = x + attn + p["bproj"]

    y2 = _layernorm(x, p["gamma2"], p["beta2"])
    h1 = jnp.dot(y2.astype(bf), p["w1"],
                 preferred_element_type=jnp.float32) + p["b1"]
    h1 = _gelu_exact(h1)
    out = x + jnp.dot(h1.astype(bf), p["w2"],
                      preferred_element_type=jnp.float32) + p["b2"]
    return out


# ------------------------- main -------------------------

if __name__ == "__main__":
    B, N, D = 2, 8, 32
    num_heads = 4
    mlp_ratio = 4.0
    Hdim = int(D * mlp_ratio)
    hd = D // num_heads

    key = jax.random.PRNGKey(0)
    keys = jax.random.split(key, 8)

    raw = {
        "gamma1": jnp.ones((1, D), jnp.float32),
        "beta1": jnp.zeros((1, D), jnp.float32),
        "wqkv": jax.random.normal(keys[0], (D, 3 * D), jnp.float32) * 0.05,
        "wproj": jax.random.normal(keys[1], (D, D), jnp.float32) * 0.05,
        "bproj": jax.random.normal(keys[2], (1, D), jnp.float32) * 0.01,
        "gamma2": jnp.ones((1, D), jnp.float32),
        "beta2": jnp.zeros((1, D), jnp.float32),
        "w1": jax.random.normal(keys[3], (D, Hdim), jnp.float32) * 0.05,
        "b1": jax.random.normal(keys[4], (1, Hdim), jnp.float32) * 0.01,
        "w2": jax.random.normal(keys[5], (Hdim, D), jnp.float32) * 0.05,
        "b2": jax.random.normal(keys[6], (1, D), jnp.float32) * 0.01,
    }
    x = jax.random.normal(keys[7], (B, N, D), jnp.float32)

    params = prepare_params(raw, num_heads=num_heads)

    out = jax.block_until_ready(block_forward(x, params, num_heads=num_heads))
    ref = jax.block_until_ready(block_reference(x, params, head_dim=hd))

    assert out.shape == (B, N, D)
    max_err = float(jnp.max(jnp.abs(out - ref)))
    # bf16 GEMM operands + approx-EUP reciprocal vs exact division in the
    # reference -> loosened tolerance.
    assert jnp.allclose(out, ref, atol=2e-2, rtol=2e-2), \
        f"mismatch vs pure-JAX reference (max abs err = {max_err})"
    print("KERNEL_OK")
</pallas_src>

<mosaic_0001>
module attributes {stable_mosaic.version = 11 : i64} {
  func.func @attn_group_kernel(%arg0: i32, %arg1: i32, %arg2: memref<1x8x32xf32, #tpu.memory_space<vmem>>, %arg3: memref<1x32xf32, #tpu.memory_space<vmem>>, %arg4: memref<1x32xf32, #tpu.memory_space<vmem>>, %arg5: memref<1x32x96xbf16, #tpu.memory_space<vmem>>, %arg6: memref<1x32x32xbf16, #tpu.memory_space<vmem>>, %arg7: memref<1x32xf32, #tpu.memory_space<vmem>>, %arg8: memref<1x8x32xf32, #tpu.memory_space<vmem>>, %arg9: memref<8x32xbf16, #tpu.memory_space<vmem>>, %arg10: memref<8x96xbf16, #tpu.memory_space<vmem>>, %arg11: memref<8x32xbf16, #tpu.memory_space<vmem>>, %arg12: memref<8x32xf32, #tpu.memory_space<vmem>>) attributes {dimension_semantics = [#tpu.dimension_semantics<parallel>, #tpu.dimension_semantics<arbitrary>], iteration_bounds = array<i64: 2, 1>, scalar_prefetch = 0 : i64, scratch_operands = 4 : i64, tpu.core_type = #tpu.core_type<tc>, window_params = [{transform_indices = @transform_0, window_bounds = array<i64: 1, 8, 32>}, {pipeline_mode = #tpu.pipeline_mode<synchronous>, transform_indices = @transform_1, window_bounds = array<i64: 1, 32>}, {pipeline_mode = #tpu.pipeline_mode<synchronous>, transform_indices = @transform_2, window_bounds = array<i64: 1, 32>}, {transform_indices = @transform_3, window_bounds = array<i64: 1, 32, 96>}, {transform_indices = @transform_4, window_bounds = array<i64: 1, 32, 32>}, {pipeline_mode = #tpu.pipeline_mode<synchronous>, transform_indices = @transform_5, window_bounds = array<i64: 1, 32>}, {transform_indices = @transform_6, window_bounds = array<i64: 1, 8, 32>}]} {
    %c0_i32 = arith.constant 0 : i32
    %0 = arith.cmpi eq, %arg1, %c0_i32 : i32
    %1 = arith.extui %0 : i1 to i32
    %c0_i32_0 = arith.constant 0 : i32
    %2 = arith.cmpi ne, %1, %c0_i32_0 : i32
    scf.if %2 {
      %c0_56 = arith.constant 0 : index
      %c0_57 = arith.constant 0 : index
      %c0_58 = arith.constant 0 : index
      %91 = vector.load %arg2[%c0_56, %c0_57, %c0_58] : memref<1x8x32xf32, #tpu.memory_space<vmem>>, vector<1x8x32xf32>
      %92 = vector.shape_cast %91 : vector<1x8x32xf32> to vector<8x32xf32>
      %c0_59 = arith.constant 0 : index
      %c0_60 = arith.constant 0 : index
      %93 = vector.load %arg3[%c0_59, %c0_60] : memref<1x32xf32, #tpu.memory_space<vmem>>, vector<1x32xf32>
      %c0_61 = arith.constant 0 : index
      %c0_62 = arith.constant 0 : index
      %94 = vector.load %arg4[%c0_61, %c0_62] : memref<1x32xf32, #tpu.memory_space<vmem>>, vector<1x32xf32>
      %cst_63 = arith.constant dense<0.000000e+00> : vector<8xf32>
      %95 = vector.multi_reduction <add>, %92, %cst_63 [1] : vector<8x32xf32> to vector<8xf32>
      %96 = vector.shape_cast %95 : vector<8xf32> to vector<8x1xf32>
      %cst_64 = arith.constant 3.200000e+01 : f32
      %97 = vector.broadcast %cst_64 : f32 to vector<8x1xf32>
      %98 = arith.divf %96, %97 : vector<8x1xf32>
      %99 = vector.broadcast %98 : vector<8x1xf32> to vector<8x32xf32>
      %100 = arith.subf %92, %99 : vector<8x32xf32>
      %101 = arith.mulf %100, %100 : vector<8x32xf32>
      %cst_65 = arith.constant dense<0.000000e+00> : vector<8xf32>
      %102 = vector.multi_reduction <add>, %101, %cst_65 [1] : vector<8x32xf32> to vector<8xf32>
      %103 = vector.shape_cast %102 : vector<8xf32> to vector<8x1xf32>
      %cst_66 = arith.constant 3.200000e+01 : f32
      %104 = vector.broadcast %cst_66 : f32 to vector<8x1xf32>
      %105 = arith.divf %103, %104 : vector<8x1xf32>
      %106 = vector.broadcast %98 : vector<8x1xf32> to vector<8x32xf32>
      %107 = arith.subf %92, %106 : vector<8x32xf32>
      %cst_67 = arith.constant 9.99999974E-6 : f32
      %108 = vector.broadcast %cst_67 : f32 to vector<8x1xf32>
      %109 = arith.addf %105, %108 : vector<8x1xf32>
      %110 = math.rsqrt %109 : vector<8x1xf32>
      %111 = vector.broadcast %110 : vector<8x1xf32> to vector<8x32xf32>
      %112 = arith.mulf %107, %111 : vector<8x32xf32>
      %113 = vector.broadcast %93 : vector<1x32xf32> to vector<8x32xf32>
      %114 = arith.mulf %112, %113 : vector<8x32xf32>
      %115 = vector.broadcast %94 : vector<1x32xf32> to vector<8x32xf32>
      %116 = arith.addf %114, %115 : vector<8x32xf32>
      %117 = arith.truncf %116 : vector<8x32xf32> to vector<8x32xbf16>
      %c0_68 = arith.constant 0 : index
      %c0_69 = arith.constant 0 : index
      %118 = vector.load %arg9[%c0_68, %c0_69] : memref<8x32xbf16, #tpu.memory_space<vmem>>, vector<8x32xbf16>
      tpu.vector_store %arg9[%c0_68, %c0_69], %117 {strides = array<i32>} : memref<8x32xbf16, #tpu.memory_space<vmem>>, vector<8x32xbf16>,
      %c0_70 = arith.constant 0 : index
      %c0_71 = arith.constant 0 : index
      %119 = vector.load %arg7[%c0_70, %c0_71] : memref<1x32xf32, #tpu.memory_space<vmem>>, vector<1x32xf32>
      %120 = vector.broadcast %119 : vector<1x32xf32> to vector<8x32xf32>
      %121 = arith.addf %92, %120 : vector<8x32xf32>
      %c0_72 = arith.constant 0 : index
      %c0_73 = arith.constant 0 : index
      %122 = vector.load %arg12[%c0_72, %c0_73] : memref<8x32xf32, #tpu.memory_space<vmem>>, vector<8x32xf32>
      tpu.vector_store %arg12[%c0_72, %c0_73], %121 {strides = array<i32>} : memref<8x32xf32, #tpu.memory_space<vmem>>, vector<8x32xf32>,
    } else {
    }
    %c0 = arith.constant 0 : index
    %c0_1 = arith.constant 0 : index
    %3 = vector.load %arg9[%c0, %c0_1] : memref<8x32xbf16, #tpu.memory_space<vmem>>, vector<8x32xbf16>
    %c0_2 = arith.constant 0 : index
    %c0_3 = arith.constant 0 : index
    %c0_4 = arith.constant 0 : index
    %4 = vector.load %arg5[%c0_2, %c0_3, %c0_4] : memref<1x32x96xbf16, #tpu.memory_space<vmem>>, vector<1x32x96xbf16>
    %5 = vector.shape_cast %4 : vector<1x32x96xbf16> to vector<32x96xbf16>
    %cst = arith.constant dense<0.000000e+00> : vector<8x96xf32>
    %6 = tpu.matmul %3, %5, %cst {dimension_numbers = #tpu.dot_dimension_numbers<[1], [0], [0], [1], [0, 0, 1, 1], [], []>} : vector<8x32xbf16>, vector<32x96xbf16>, vector<8x96xf32> -> vector<8x96xf32>
    %7 = arith.truncf %6 : vector<8x96xf32> to vector<8x96xbf16>
    %c0_5 = arith.constant 0 : index
    %c0_6 = arith.constant 0 : index
    %8 = vector.load %arg10[%c0_5, %c0_6] : memref<8x96xbf16, #tpu.memory_space<vmem>>, vector<8x96xbf16>
    tpu.vector_store %arg10[%c0_5, %c0_6], %7 {strides = array<i32>} : memref<8x96xbf16, #tpu.memory_space<vmem>>, vector<8x96xbf16>,
    %c0_7 = arith.constant 0 : index
    %c0_8 = arith.constant 0 : index
    %9 = vector.load %arg10[%c0_7, %c0_8] : memref<8x96xbf16, #tpu.memory_space<vmem>>, vector<8x8xbf16>
    %c0_9 = arith.constant 0 : index
    %c32 = arith.constant 32 : index
    %10 = vector.load %arg10[%c0_9, %c32] : memref<8x96xbf16, #tpu.memory_space<vmem>>, vector<8x8xbf16>
    %c0_10 = arith.constant 0 : index
    %c64 = arith.constant 64 : index
    %11 = vector.load %arg10[%c0_10, %c64] : memref<8x96xbf16, #tpu.memory_space<vmem>>, vector<8x8xbf16>
    "tpu.trace_start"() <{level = 10 : i32, message = "qd,kd->qk"}> : () -> ()
    %cst_11 = arith.constant dense<0.000000e+00> : vector<8x8xf32>
    %12 = tpu.matmul %9, %10, %cst_11 {dimension_numbers = #tpu.dot_dimension_numbers<[1], [1], [0], [0], [0, 0, 1, 0], [], []>} : vector<8x8xbf16>, vector<8x8xbf16>, vector<8x8xf32> -> vector<8x8xf32>
    "tpu.trace_stop"() : () -> ()
    %cst_12 = arith.constant dense<0xFF800000> : vector<8xf32>
    %13 = vector.multi_reduction <maximumf>, %12, %cst_12 [1] : vector<8x8xf32> to vector<8xf32>
    %14 = vector.shape_cast %13 : vector<8xf32> to vector<8x1xf32>
    %15 = vector.broadcast %14 : vector<8x1xf32> to vector<8x8xf32>
    %16 = arith.subf %12, %15 : vector<8x8xf32>
    %17 = math.exp %16 : vector<8x8xf32>
    %cst_13 = arith.constant dense<0.000000e+00> : vector<8xf32>
    %18 = vector.multi_reduction <add>, %17, %cst_13 [1] : vector<8x8xf32> to vector<8xf32>
    %19 = vector.shape_cast %18 : vector<8xf32> to vector<8x1xf32>
    %20 = tpu.reciprocal %19 {approx = true} : vector<8x1xf32> -> vector<8x1xf32>
    %21 = vector.broadcast %20 : vector<8x1xf32> to vector<8x8xf32>
    %22 = arith.mulf %17, %21 : vector<8x8xf32>
    %23 = arith.truncf %22 : vector<8x8xf32> to vector<8x8xbf16>
    %cst_14 = arith.constant dense<0.000000e+00> : vector<8x8xf32>
    %24 = tpu.matmul %23, %11, %cst_14 {dimension_numbers = #tpu.dot_dimension_numbers<[1], [0], [0], [1], [0, 0, 1, 1], [], []>} : vector<8x8xbf16>, vector<8x8xbf16>, vector<8x8xf32> -> vector<8x8xf32>
    %25 = arith.truncf %24 : vector<8x8xf32> to vector<8x8xbf16>
    %c0_15 = arith.constant 0 : index
    %c0_16 = arith.constant 0 : index
    %26 = vector.load %arg11[%c0_15, %c0_16] : memref<8x32xbf16, #tpu.memory_space<vmem>>, vector<8x8xbf16>
    tpu.vector_store %arg11[%c0_15, %c0_16], %25 {strides = array<i32>} : memref<8x32xbf16, #tpu.memory_space<vmem>>, vector<8x8xbf16>,
    %c0_17 = arith.constant 0 : index
    %c8 = arith.constant 8 : index
    %27 = vector.load %arg10[%c0_17, %c8] : memref<8x96xbf16, #tpu.memory_space<vmem>>, vector<8x8xbf16>
    %c0_18 = arith.constant 0 : index
    %c40 = arith.constant 40 : index
    %28 = vector.load %arg10[%c0_18, %c40] : memref<8x96xbf16, #tpu.memory_space<vmem>>, vector<8x8xbf16>
    %c0_19 = arith.constant 0 : index
    %c72 = arith.constant 72 : index
    %29 = vector.load %arg10[%c0_19, %c72] : memref<8x96xbf16, #tpu.memory_space<vmem>>, vector<8x8xbf16>
    "tpu.trace_start"() <{level = 10 : i32, message = "qd,kd->qk"}> : () -> ()
    %cst_20 = arith.constant dense<0.000000e+00> : vector<8x8xf32>
    %30 = tpu.matmul %27, %28, %cst_20 {dimension_numbers = #tpu.dot_dimension_numbers<[1], [1], [0], [0], [0, 0, 1, 0], [], []>} : vector<8x8xbf16>, vector<8x8xbf16>, vector<8x8xf32> -> vector<8x8xf32>
    "tpu.trace_stop"() : () -> ()
    %cst_21 = arith.constant dense<0xFF800000> : vector<8xf32>
    %31 = vector.multi_reduction <maximumf>, %30, %cst_21 [1] : vector<8x8xf32> to vector<8xf32>
    %32 = vector.shape_cast %31 : vector<8xf32> to vector<8x1xf32>
    %33 = vector.broadcast %32 : vector<8x1xf32> to vector<8x8xf32>
    %34 = arith.subf %30, %33 : vector<8x8xf32>
    %35 = math.exp %34 : vector<8x8xf32>
    %cst_22 = arith.constant dense<0.000000e+00> : vector<8xf32>
    %36 = vector.multi_reduction <add>, %35, %cst_22 [1] : vector<8x8xf32> to vector<8xf32>
    %37 = vector.shape_cast %36 : vector<8xf32> to vector<8x1xf32>
    %38 = tpu.reciprocal %37 {approx = true} : vector<8x1xf32> -> vector<8x1xf32>
    %39 = vector.broadcast %38 : vector<8x1xf32> to vector<8x8xf32>
    %40 = arith.mulf %35, %39 : vector<8x8xf32>
    %41 = arith.truncf %40 : vector<8x8xf32> to vector<8x8xbf16>
    %cst_23 = arith.constant dense<0.000000e+00> : vector<8x8xf32>
    %42 = tpu.matmul %41, %29, %cst_23 {dimension_numbers = #tpu.dot_dimension_numbers<[1], [0], [0], [1], [0, 0, 1, 1], [], []>} : vector<8x8xbf16>, vector<8x8xbf16>, vector<8x8xf32> -> vector<8x8xf32>
    %43 = arith.truncf %42 : vector<8x8xf32> to vector<8x8xbf16>
    %c0_24 = arith.constant 0 : index
    %c8_25 = arith.constant 8 : index
    %44 = vector.load %arg11[%c0_24, %c8_25] : memref<8x32xbf16, #tpu.memory_space<vmem>>, vector<8x8xbf16>
    tpu.vector_store %arg11[%c0_24, %c8_25], %43 {strides = array<i32>} : memref<8x32xbf16, #tpu.memory_space<vmem>>, vector<8x8xbf16>,
    %c0_26 = arith.constant 0 : index
    %c16 = arith.constant 16 : index
    %45 = vector.load %arg10[%c0_26, %c16] : memref<8x96xbf16, #tpu.memory_space<vmem>>, vector<8x8xbf16>
    %c0_27 = arith.constant 0 : index
    %c48 = arith.constant 48 : index
    %46 = vector.load %arg10[%c0_27, %c48] : memref<8x96xbf16, #tpu.memory_space<vmem>>, vector<8x8xbf16>
    %c0_28 = arith.constant 0 : index
    %c80 = arith.constant 80 : index
    %47 = vector.load %arg10[%c0_28, %c80] : memref<8x96xbf16, #tpu.memory_space<vmem>>, vector<8x8xbf16>
    "tpu.trace_start"() <{level = 10 : i32, message = "qd,kd->qk"}> : () -> ()
    %cst_29 = arith.constant dense<0.000000e+00> : vector<8x8xf32>
    %48 = tpu.matmul %45, %46, %cst_29 {dimension_numbers = #tpu.dot_dimension_numbers<[1], [1], [0], [0], [0, 0, 1, 0], [], []>} : vector<8x8xbf16>, vector<8x8xbf16>, vector<8x8xf32> -> vector<8x8xf32>
    "tpu.trace_stop"() : () -> ()
    %cst_30 = arith.constant dense<0xFF800000> : vector<8xf32>
    %49 = vector.multi_reduction <maximumf>, %48, %cst_30 [1] : vector<8x8xf32> to vector<8xf32>
    %50 = vector.shape_cast %49 : vector<8xf32> to vector<8x1xf32>
    %51 = vector.broadcast %50 : vector<8x1xf32> to vector<8x8xf32>
    %52 = arith.subf %48, %51 : vector<8x8xf32>
    %53 = math.exp %52 : vector<8x8xf32>
    %cst_31 = arith.constant dense<0.000000e+00> : vector<8xf32>
    %54 = vector.multi_reduction <add>, %53, %cst_31 [1] : vector<8x8xf32> to vector<8xf32>
    %55 = vector.shape_cast %54 : vector<8xf32> to vector<8x1xf32>
    %56 = tpu.reciprocal %55 {approx = true} : vector<8x1xf32> -> vector<8x1xf32>
    %57 = vector.broadcast %56 : vector<8x1xf32> to vector<8x8xf32>
    %58 = arith.mulf %53, %57 : vector<8x8xf32>
    %59 = arith.truncf %58 : vector<8x8xf32> to vector<8x8xbf16>
    %cst_32 = arith.constant dense<0.000000e+00> : vector<8x8xf32>
    %60 = tpu.matmul %59, %47, %cst_32 {dimension_numbers = #tpu.dot_dimension_numbers<[1], [0], [0], [1], [0, 0, 1, 1], [], []>} : vector<8x8xbf16>, vector<8x8xbf16>, vector<8x8xf32> -> vector<8x8xf32>
    %61 = arith.truncf %60 : vector<8x8xf32> to vector<8x8xbf16>
    %c0_33 = arith.constant 0 : index
    %c16_34 = arith.constant 16 : index
    %62 = vector.load %arg11[%c0_33, %c16_34] : memref<8x32xbf16, #tpu.memory_space<vmem>>, vector<8x8xbf16>
    tpu.vector_store %arg11[%c0_33, %c16_34], %61 {strides = array<i32>} : memref<8x32xbf16, #tpu.memory_space<vmem>>, vector<8x8xbf16>,
    %c0_35 = arith.constant 0 : index
    %c24 = arith.constant 24 : index
    %63 = vector.load %arg10[%c0_35, %c24] : memref<8x96xbf16, #tpu.memory_space<vmem>>, vector<8x8xbf16>
    %c0_36 = arith.constant 0 : index
    %c56 = arith.constant 56 : index
    %64 = vector.load %arg10[%c0_36, %c56] : memref<8x96xbf16, #tpu.memory_space<vmem>>, vector<8x8xbf16>
    %c0_37 = arith.constant 0 : index
    %c88 = arith.constant 88 : index
    %65 = vector.load %arg10[%c0_37, %c88] : memref<8x96xbf16, #tpu.memory_space<vmem>>, vector<8x8xbf16>
    "tpu.trace_start"() <{level = 10 : i32, message = "qd,kd->qk"}> : () -> ()
    %cst_38 = arith.constant dense<0.000000e+00> : vector<8x8xf32>
    %66 = tpu.matmul %63, %64, %cst_38 {dimension_numbers = #tpu.dot_dimension_numbers<[1], [1], [0], [0], [0, 0, 1, 0], [], []>} : vector<8x8xbf16>, vector<8x8xbf16>, vector<8x8xf32> -> vector<8x8xf32>
    "tpu.trace_stop"() : () -> ()
    %cst_39 = arith.constant dense<0xFF800000> : vector<8xf32>
    %67 = vector.multi_reduction <maximumf>, %66, %cst_39 [1] : vector<8x8xf32> to vector<8xf32>
    %68 = vector.shape_cast %67 : vector<8xf32> to vector<8x1xf32>
    %69 = vector.broadcast %68 : vector<8x1xf32> to vector<8x8xf32>
    %70 = arith.subf %66, %69 : vector<8x8xf32>
    %71 = math.exp %70 : vector<8x8xf32>
    %cst_40 = arith.constant dense<0.000000e+00> : vector<8xf32>
    %72 = vector.multi_reduction <add>, %71, %cst_40 [1] : vector<8x8xf32> to vector<8xf32>
    %73 = vector.shape_cast %72 : vector<8xf32> to vector<8x1xf32>
    %74 = tpu.reciprocal %73 {approx = true} : vector<8x1xf32> -> vector<8x1xf32>
    %75 = vector.broadcast %74 : vector<8x1xf32> to vector<8x8xf32>
    %76 = arith.mulf %71, %75 : vector<8x8xf32>
    %77 = arith.truncf %76 : vector<8x8xf32> to vector<8x8xbf16>
    %cst_41 = arith.constant dense<0.000000e+00> : vector<8x8xf32>
    %78 = tpu.matmul %77, %65, %cst_41 {dimension_numbers = #tpu.dot_dimension_numbers<[1], [0], [0], [1], [0, 0, 1, 1], [], []>} : vector<8x8xbf16>, vector<8x8xbf16>, vector<8x8xf32> -> vector<8x8xf32>
    %79 = arith.truncf %78 : vector<8x8xf32> to vector<8x8xbf16>
    %c0_42 = arith.constant 0 : index
    %c24_43 = arith.constant 24 : index
    %80 = vector.load %arg11[%c0_42, %c24_43] : memref<8x32xbf16, #tpu.memory_space<vmem>>, vector<8x8xbf16>
    tpu.vector_store %arg11[%c0_42, %c24_43], %79 {strides = array<i32>} : memref<8x32xbf16, #tpu.memory_space<vmem>>, vector<8x8xbf16>,
    %c0_44 = arith.constant 0 : index
    %c0_45 = arith.constant 0 : index
    %81 = vector.load %arg12[%c0_44, %c0_45] : memref<8x32xf32, #tpu.memory_space<vmem>>, vector<8x32xf32>
    %c0_46 = arith.constant 0 : index
    %c0_47 = arith.constant 0 : index
    %82 = vector.load %arg11[%c0_46, %c0_47] : memref<8x32xbf16, #tpu.memory_space<vmem>>, vector<8x32xbf16>
    %c0_48 = arith.constant 0 : index
    %c0_49 = arith.constant 0 : index
    %c0_50 = arith.constant 0 : index
    %83 = vector.load %arg6[%c0_48, %c0_49, %c0_50] : memref<1x32x32xbf16, #tpu.memory_space<vmem>>, vector<1x32x32xbf16>
    %84 = vector.shape_cast %83 : vector<1x32x32xbf16> to vector<32x32xbf16>
    %cst_51 = arith.constant dense<0.000000e+00> : vector<8x32xf32>
    %85 = tpu.matmul %82, %84, %cst_51 {dimension_numbers = #tpu.dot_dimension_numbers<[1], [0], [0], [1], [0, 0, 1, 1], [], []>} : vector<8x32xbf16>, vector<32x32xbf16>, vector<8x32xf32> -> vector<8x32xf32>
    %86 = arith.addf %81, %85 : vector<8x32xf32>
    %c0_52 = arith.constant 0 : index
    %c0_53 = arith.constant 0 : index
    %87 = vector.load %arg12[%c0_52, %c0_53] : memref<8x32xf32, #tpu.memory_space<vmem>>, vector<8x32xf32>
    tpu.vector_store %arg12[%c0_52, %c0_53], %86 {strides = array<i32>} : memref<8x32xf32, #tpu.memory_space<vmem>>, vector<8x32xf32>,
    %c0_i32_54 = arith.constant 0 : i32
    %88 = arith.cmpi eq, %arg1, %c0_i32_54 : i32
    %89 = arith.extui %88 : i1 to i32
    %c0_i32_55 = arith.constant 0 : i32
    %90 = arith.cmpi ne, %89, %c0_i32_55 : i32
    scf.if %90 {
      %c0_56 = arith.constant 0 : index
      %c0_57 = arith.constant 0 : index
      %91 = vector.load %arg12[%c0_56, %c0_57] : memref<8x32xf32, #tpu.memory_space<vmem>>, vector<8x32xf32>
      %c0_58 = arith.constant 0 : index
      %c0_59 = arith.constant 0 : index
      %c0_60 = arith.constant 0 : index
      %92 = vector.load %arg8[%c0_58, %c0_59, %c0_60] : memref<1x8x32xf32, #tpu.memory_space<vmem>>, vector<1x8x32xf32>
      %93 = vector.shape_cast %92 : vector<1x8x32xf32> to vector<8x32xf32>
      %94 = vector.shape_cast %91 : vector<8x32xf32> to vector<1x8x32xf32>
      tpu.vector_store %arg8[%c0_58, %c0_59, %c0_60], %94 {strides = array<i32>} : memref<1x8x32xf32, #tpu.memory_space<vmem>>, vector<1x8x32xf32>,
    } else {
    }
    return
  }
  func.func @transform_0(%arg0: i32, %arg1: i32) -> (i32, i32, i32) {
    %c0_i32 = arith.constant 0 : i32
    %c0_i32_0 = arith.constant 0 : i32
    %c0_i32_1 = arith.constant 0 : i32
    return %arg0, %c0_i32, %c0_i32_0 : i32, i32, i32
  }
  func.func @transform_1(%arg0: i32, %arg1: i32) -> (i32, i32) {
    %c0_i32 = arith.constant 0 : i32
    %c0_i32_0 = arith.constant 0 : i32
    %c0_i32_1 = arith.constant 0 : i32
    return %c0_i32, %c0_i32_0 : i32, i32
  }
  func.func @transform_2(%arg0: i32, %arg1: i32) -> (i32, i32) {
    %c0_i32 = arith.constant 0 : i32
    %c0_i32_0 = arith.constant 0 : i32
    %c0_i32_1 = arith.constant 0 : i32
    return %c0_i32, %c0_i32_0 : i32, i32
  }
  func.func @transform_3(%arg0: i32, %arg1: i32) -> (i32, i32, i32) {
    %c0_i32 = arith.constant 0 : i32
    %c0_i32_0 = arith.constant 0 : i32
    %c0_i32_1 = arith.constant 0 : i32
    return %arg1, %c0_i32, %c0_i32_0 : i32, i32, i32
  }
  func.func @transform_4(%arg0: i32, %arg1: i32) -> (i32, i32, i32) {
    %c0_i32 = arith.constant 0 : i32
    %c0_i32_0 = arith.constant 0 : i32
    %c0_i32_1 = arith.constant 0 : i32
    return %arg1, %c0_i32, %c0_i32_0 : i32, i32, i32
  }
  func.func @transform_5(%arg0: i32, %arg1: i32) -> (i32, i32) {
    %c0_i32 = arith.constant 0 : i32
    %c0_i32_0 = arith.constant 0 : i32
    %c0_i32_1 = arith.constant 0 : i32
    return %c0_i32, %c0_i32_0 : i32, i32
  }
  func.func @transform_6(%arg0: i32, %arg1: i32) -> (i32, i32, i32) {
    %c0_i32 = arith.constant 0 : i32
    %c0_i32_0 = arith.constant 0 : i32
    %c0_i32_1 = arith.constant 0 : i32
    return %arg0, %c0_i32, %c0_i32_0 : i32, i32, i32
  }
}

</mosaic_0001>

<llo_original>
// kernel: tpu_custom_call.1
$region0: #{tpu_custom_call.1}
  #allocation0 [shape = 'u32[]', space=smem, size = 0x4, offset = 0x4, fixed_abs, tag = 'smem constant byte address 0x4 - core index']
  #allocation1 [shape = 'u32[72,128]{1,0:T(1,128)}', space=vmem, size = 0x9000, scoped, tag = 'internal scratch']
  #allocation2 [shape = 'bf16[8,32]{1,0:T(8,128)(2,1)}', space=vmem, size = 0x800, scoped, tag = 'scratch operand']
  #allocation3 [shape = 'bf16[8,96]{1,0:T(8,128)(2,1)}', space=vmem, size = 0x800, scoped, tag = 'scratch operand']
  #allocation4 [shape = 'bf16[8,32]{1,0:T(8,128)(2,1)}', space=vmem, size = 0x800, scoped, tag = 'scratch operand']
  #allocation5 [shape = 'f32[8,32]{1,0:T(8,128)}', space=vmem, size = 0x1000, scoped, tag = 'scratch operand']
  %s0 = inlined_call_operand.hbm [shape: f32[2,8,32], index: 0, kind: input, shape index: {}]
  %s1 = inlined_call_operand.hbm [shape: f32[1,32], index: 1, kind: input, shape index: {}]
  %s2 = inlined_call_operand.vmem [shape: f32[1,32], index: 2, kind: input, shape index: {}]
  %s3 = inlined_call_operand.hbm [shape: bf16[1,32,96], index: 3, kind: input, shape index: {}]
  %s4 = inlined_call_operand.hbm [shape: bf16[1,32,32], index: 4, kind: input, shape index: {}]
  %s5 = inlined_call_operand.vmem [shape: f32[1,32], index: 5, kind: input, shape index: {}]
  %s6 = inlined_call_operand.hbm [shape: f32[2,8,32], index: 6, kind: output, shape index: {}]
  %s7 = sld [smem:[#allocation0]]
  $region81: #{tpu_custom_call.1} parent=0
    _
  %s9 = ssub.s32 1, %s7
  %s10 = scalar_select 0, %s9, %s7
  $region1: #{tpu_custom_call.1} parent=0
    #allocation6 [shape = 'u8[8192]{0}', space=vmem, size = 0x2000, scoped, tag = 'input window, operand 0']
    #allocation7 [shape = 's32[2]{0}', space=sflag, size = 0x8, scoped, tag = 'scoped memory for tpu_custom_call.1']
    #allocation8 [shape = 's32[2]{0}', space=sflag, size = 0x8, scoped, tag = 'scoped memory for tpu_custom_call.1']
    #allocation9 [shape = 'u8[512]{0}', space=vmem, size = 0x400, scoped, tag = 'input window, operand 1, single buffered']
    #allocation10 [shape = 's32[1]{0}', space=sflag, size = 0x4, scoped, tag = 'scoped memory for tpu_custom_call.1']
    #allocation11 [shape = 'u8[8192]{0}', space=vmem, size = 0x2000, scoped, tag = 'input window, operand 3, single buffered']
    #allocation12 [shape = 'u8[8192]{0}', space=vmem, size = 0x2000, scoped, tag = 'input window, operand 4, single buffered']
    #allocation13 [shape = 's32[1]{0}', space=sflag, size = 0x4, scoped, tag = 'scoped memory for tpu_custom_call.1']
    #allocation14 [shape = 'u8[8192]{0}', space=vmem, size = 0x2000, scoped, tag = 'output window, operand 0']
    %11 = vsyncpa [#allocation7], 0
    %s12 = scalar_lea.sflag [#allocation7], 1
    %13 = vsyncpa %s12, 0
    %14 = vsyncpa [#allocation10], 0
    %15 = vsyncpa [#allocation13], 0
    %16 = vsyncpa [#allocation8], 0
    %s17 = scalar_lea.sflag [#allocation8], 1
    %18 = vsyncpa %s17, 0
    loop: start=0, step=1, limit=4
    $region2: #{tpu_custom_call.1} parent=1 // loop_pre_header
      _
    $region3: #{tpu_custom_call.1} parent=1 // loop_header
      %s20 = sphi 0, %s24
      %p21 = scmp.ge.s32.totalorder %s20, 4
      %s27 = sphi 0, %s39
      %s28 = sphi 0, %s35
      %s29 = sphi 0, %s27
      %s30 = sphi 0, %s28
      %s31 = sphi 0, %s29
      %s32 = sphi 0, %s30
      %s42 = sphi 0, %s44
      %s45 = sphi 0, %s42
      %s46 = sphi 0, %s45
      %s62 = sphi 0, %s46
      %s66 = sphi 0, %s66
      %s68 = sphi 0, %s66
      %s69 = sphi 0, %s68
      %s83 = sphi 0, %s69
      %s87 = sphi 0, %s87
      %s89 = sphi 0, %s87
      %s90 = sphi 0, %s89
      %s104 = sphi 0, %s90
      %s110 = sphi 0, %s112
      %s113 = sphi 0, %s110
      %s114 = sphi 0, %s113
      %s130 = sphi 0, %s114
      %s136 = sphi 0, %s138
      %s139 = sphi 0, %s136
      %s140 = sphi 0, %s139
      %s156 = sphi 0, %s140
      %s160 = sphi 0, %s160
      %s162 = sphi 0, %s160
      %s163 = sphi 0, %s162
      %s177 = sphi 0, %s163
      %s183 = sphi 0, %s185
      %s186 = sphi 0, %s183
      %s187 = sphi 0, %s186
      %s203 = sphi 0, %s187
    $region4: #{tpu_custom_call.1} parent=1 // loop_header_branch
      %23 = sbr.rel (%p21) target = $region8
    $region5: #{tpu_custom_call.1} parent=1 // loop_body
      %s25 = ssub.s32 %s20, 1
      %s26 = ssub.s32 %s20, 2
      %s33 = sadd.s32 1, %s28
      %p34 = scmp.ge.s32.totalorder %s33, 1
      %s35 = scalar_select %p34, 0, %s33
      %s36 = sadd.s32 1, %s27
      %s37 = scalar_select %p34, %s36, %s27
      %p38 = scmp.ge.s32.totalorder %s37, 2
      %s39 = scalar_select %p38, 0, %s37
      %s40 = ssub.s32 %s27, %s39
      %p41 = scmp.eq.s32.totalorder %s40, 0
      %s43 = sadd.s32 %s42, 1
      %s44 = scalar_select %p41, %s42, %s43
      %p47 = pneg %p41
      %p48 = scmp.eq.s32.totalorder %s20, 1
      %p49 = por %p47, %p48
      %p50 = scmp.ne.s32.totalorder %s42, %s45
      %p51 = scmp.eq.s32.totalorder %s20, 0
      %p52 = por %p50, %p51
      %p53 = scmp.ne.s32.totalorder %s42, %s45
      %p54 = scmp.eq.s32.totalorder %s25, 1
      %p55 = por %p53, %p54
      %p56 = scmp.ne.s32.totalorder %s45, %s46
      %p57 = scmp.eq.s32.totalorder %s25, 0
      %p58 = por %p56, %p57
      %p59 = scmp.ne.s32.totalorder %s45, %s46
      %p60 = scmp.eq.s32.totalorder %s26, 1
      %p61 = por %p59, %p60
      %p63 = scmp.ne.s32.totalorder %s46, %s62
      %p64 = scmp.eq.s32.totalorder %s26, 0
      %p65 = por %p63, %p64
      %s67 = sadd.s32 %s66, 1
      %p70 = scmp.eq.s32.totalorder %s20, 1
      %p71 = scmp.ne.s32.totalorder %s66, %s68
      %p72 = scmp.eq.s32.totalorder %s20, 0
      %p73 = por %p71, %p72
      %p74 = scmp.ne.s32.totalorder %s66, %s68
      %p75 = scmp.eq.s32.totalorder %s25, 1
      %p76 = por %p74, %p75
      %p77 = scmp.ne.s32.totalorder %s68, %s69
      %p78 = scmp.eq.s32.totalorder %s25, 0
      %p79 = por %p77, %p78
      %p80 = scmp.ne.s32.totalorder %s68, %s69
      %p81 = scmp.eq.s32.totalorder %s26, 1
      %p82 = por %p80, %p81
      %p84 = scmp.ne.s32.totalorder %s69, %s83
      %p85 = scmp.eq.s32.totalorder %s26, 0
      %p86 = por %p84, %p85
      %s88 = sadd.s32 %s87, 1
      %p91 = scmp.eq.s32.totalorder %s20, 1
      %p92 = scmp.ne.s32.totalorder %s87, %s89
      %p93 = scmp.eq.s32.totalorder %s20, 0
      %p94 = por %p92, %p93
      %p95 = scmp.ne.s32.totalorder %s87, %s89
      %p96 = scmp.eq.s32.totalorder %s25, 1
      %p97 = por %p95, %p96
      %p98 = scmp.ne.s32.totalorder %s89, %s90
      %p99 = scmp.eq.s32.totalorder %s25, 0
      %p100 = por %p98, %p99
      %p101 = scmp.ne.s32.totalorder %s89, %s90
      %p102 = scmp.eq.s32.totalorder %s26, 1
      %p103 = por %p101, %p102
      %p105 = scmp.ne.s32.totalorder %s90, %s104
      %p106 = scmp.eq.s32.totalorder %s26, 0
      %p107 = por %p105, %p106
      %s108 = ssub.s32 %s28, %s35
      %p109 = scmp.eq.s32.totalorder %s108, 0
      %s111 = sadd.s32 %s110, 1
      %s112 = scalar_select %p109, %s110, %s111
      %p115 = pneg %p109
      %p116 = scmp.eq.s32.totalorder %s20, 1
      %p117 = por %p115, %p116
      %p118 = scmp.ne.s32.totalorder %s110, %s113
      %p119 = scmp.eq.s32.totalorder %s20, 0
      %p120 = por %p118, %p119
      %p121 = scmp.ne.s32.totalorder %s110, %s113
      %p122 = scmp.eq.s32.totalorder %s25, 1
      %p123 = por %p121, %p122
      %p124 = scmp.ne.s32.totalorder %s113, %s114
      %p125 = scmp.eq.s32.totalorder %s25, 0
      %p126 = por %p124, %p125
      %p127 = scmp.ne.s32.totalorder %s113, %s114
      %p128 = scmp.eq.s32.totalorder %s26, 1
      %p129 = por %p127, %p128
      %p131 = scmp.ne.s32.totalorder %s114, %s130
      %p132 = scmp.eq.s32.totalorder %s26, 0
      %p133 = por %p131, %p132
      %s134 = ssub.s32 %s28, %s35
      %p135 = scmp.eq.s32.totalorder %s134, 0
      %s137 = sadd.s32 %s136, 1
      %s138 = scalar_select %p135, %s136, %s137
      %p141 = pneg %p135
      %p142 = scmp.eq.s32.totalorder %s20, 1
      %p143 = por %p141, %p142
      %p144 = scmp.ne.s32.totalorder %s136, %s139
      %p145 = scmp.eq.s32.totalorder %s20, 0
      %p146 = por %p144, %p145
      %p147 = scmp.ne.s32.totalorder %s136, %s139
      %p148 = scmp.eq.s32.totalorder %s25, 1
      %p149 = por %p147, %p148
      %p150 = scmp.ne.s32.totalorder %s139, %s140
      %p151 = scmp.eq.s32.totalorder %s25, 0
      %p152 = por %p150, %p151
      %p153 = scmp.ne.s32.totalorder %s139, %s140
      %p154 = scmp.eq.s32.totalorder %s26, 1
      %p155 = por %p153, %p154
      %p157 = scmp.ne.s32.totalorder %s140, %s156
      %p158 = scmp.eq.s32.totalorder %s26, 0
      %p159 = por %p157, %p158
      %s161 = sadd.s32 %s160, 1
      %p164 = scmp.eq.s32.totalorder %s20, 1
      %p165 = scmp.ne.s32.totalorder %s160, %s162
      %p166 = scmp.eq.s32.totalorder %s20, 0
      %p167 = por %p165, %p166
      %p168 = scmp.ne.s32.totalorder %s160, %s162
      %p169 = scmp.eq.s32.totalorder %s25, 1
      %p170 = por %p168, %p169
      %p171 = scmp.ne.s32.totalorder %s162, %s163
      %p172 = scmp.eq.s32.totalorder %s25, 0
      %p173 = por %p171, %p172
      %p174 = scmp.ne.s32.totalorder %s162, %s163
      %p175 = scmp.eq.s32.totalorder %s26, 1
      %p176 = por %p174, %p175
      %p178 = scmp.ne.s32.totalorder %s163, %s177
      %p179 = scmp.eq.s32.totalorder %s26, 0
      %p180 = por %p178, %p179
      %s181 = ssub.s32 %s27, %s39
      %p182 = scmp.eq.s32.totalorder %s181, 0
      %s184 = sadd.s32 %s183, 1
      %s185 = scalar_select %p182, %s183, %s184
      %p188 = pneg %p182
      %p189 = scmp.eq.s32.totalorder %s20, 1
      %p190 = por %p188, %p189
      %p191 = scmp.ne.s32.totalorder %s183, %s186
      %p192 = scmp.eq.s32.totalorder %s20, 0
      %p193 = por %p191, %p192
      %p194 = scmp.ne.s32.totalorder %s183, %s186
      %p195 = scmp.eq.s32.totalorder %s25, 1
      %p196 = por %p194, %p195
      %p197 = scmp.ne.s32.totalorder %s186, %s187
      %p198 = scmp.eq.s32.totalorder %s25, 0
      %p199 = por %p197, %p198
      %p200 = scmp.ne.s32.totalorder %s186, %s187
      %p201 = scmp.eq.s32.totalorder %s26, 1
      %p202 = por %p200, %p201
      %p204 = scmp.ne.s32.totalorder %s187, %s203
      %p205 = scmp.eq.s32.totalorder %s26, 0
      %p206 = por %p204, %p205
      %p207 = scmp.le.s32.totalorder 1, %s20
      %p208 = scmp.lt.s32.totalorder %s20, 3
      %p209 = pnand %p207, %p208
      %p210 = pneg %p209
      // Predicated region
      $region9: #{tpu_custom_call.1} parent=5 // pred_check
        _
      $region10: #{tpu_custom_call.1} parent=5 // pred_check_branch
        %212 = sbr.rel (%p209) target = $region12
      $region11: #{tpu_custom_call.1} parent=5 // pred_region
        %s213 = ssub.s32 %s20, 1
        // Predicated region
        $region13: #{tpu_custom_call.1} parent=11 // pred_check
          %p214 = pneg %p79
        $region14: #{tpu_custom_call.1} parent=11 // pred_check_branch
          %216 = sbr.rel (%p214) target = $region16
        $region15: #{tpu_custom_call.1} parent=11 // pred_region
          %218 = vsyncadd [#allocation10], 0
          %s220 = sshll.u32 %s1, 4
          %s221 = int_to_ptr.hbm [resolvable:$true] %s220
          %s222 = sshll.u32 [#allocation9], 4
          %s223 = int_to_ptr.vmem [resolvable:$true] %s222
          %225 = dma.hbm_to_vmem [thread:$0]  %s221, 16, %s223, [#allocation10]
        $region16: #{tpu_custom_call.1} parent=11 // pred_fallthru
          _
        // Predicated region
        $region17: #{tpu_custom_call.1} parent=11 // pred_check
          %p226 = pneg %p100
        $region18: #{tpu_custom_call.1} parent=11 // pred_check_branch
          %228 = sbr.rel (%p226) target = $region20
        $region19: #{tpu_custom_call.1} parent=11 // pred_region
          _
        $region20: #{tpu_custom_call.1} parent=11 // pred_fallthru
          _
        // Predicated region
        $region21: #{tpu_custom_call.1} parent=11 // pred_check
          %p229 = pneg %p126
        $region22: #{tpu_custom_call.1} parent=11 // pred_check_branch
          %231 = sbr.rel (%p229) target = $region24
        $region23: #{tpu_custom_call.1} parent=11 // pred_region
          %233 = vsyncadd [#allocation10], 0
          %s234 = smul.addr %s30, 4
          %s235 = smul.addr %s234, 4
          %s236 = scalar_lea.hbm %s3, %s235
          %s237 = sshll.u32 %s236, 4
          %s238 = int_to_ptr.hbm [resolvable:$true] %s237
          %s239 = sshll.u32 [#allocation11], 4
          %s240 = int_to_ptr.vmem [resolvable:$true] %s239
          %245 = dma.hbm_to_vmem [thread:$0]  %s238, 256, %s240, [#allocation10], 64, 64, 4
        $region24: #{tpu_custom_call.1} parent=11 // pred_fallthru
          _
        // Predicated region
        $region25: #{tpu_custom_call.1} parent=11 // pred_check
          %p246 = pneg %p152
        $region26: #{tpu_custom_call.1} parent=11 // pred_check_branch
          %248 = sbr.rel (%p246) target = $region28
        $region27: #{tpu_custom_call.1} parent=11 // pred_region
          %250 = vsyncadd [#allocation13], 0
          %s251 = smul.addr %s30, 4
          %s252 = smul.addr %s251, 4
          %s253 = scalar_lea.hbm %s4, %s252
          %s254 = sshll.u32 %s253, 4
          %s255 = int_to_ptr.hbm [resolvable:$true] %s254
          %s256 = sshll.u32 [#allocation12], 4
          %s257 = int_to_ptr.vmem [resolvable:$true] %s256
          %262 = dma.hbm_to_vmem [thread:$0]  %s255, 256, %s257, [#allocation13], 64, 64, 4
        $region28: #{tpu_custom_call.1} parent=11 // pred_fallthru
          _
        // Predicated region
        $region29: #{tpu_custom_call.1} parent=11 // pred_check
          %p263 = pneg %p173
        $region30: #{tpu_custom_call.1} parent=11 // pred_check_branch
          %265 = sbr.rel (%p263) target = $region32
        $region31: #{tpu_custom_call.1} parent=11 // pred_region
          _
        $region32: #{tpu_custom_call.1} parent=11 // pred_fallthru
          _
      $region12: #{tpu_custom_call.1} parent=5 // pred_fallthru
        _
      %p266 = scmp.lt.s32.totalorder %s20, 2
      // Predicated region
      $region33: #{tpu_custom_call.1} parent=5 // pred_check
        %p267 = pneg %p266
      $region34: #{tpu_custom_call.1} parent=5 // pred_check_branch
        %269 = sbr.rel (%p267) target = $region36
      $region35: #{tpu_custom_call.1} parent=5 // pred_region
        // Predicated region
        $region37: #{tpu_custom_call.1} parent=35 // pred_check
          %p270 = pneg %p52
        $region38: #{tpu_custom_call.1} parent=35 // pred_check_branch
          %272 = sbr.rel (%p270) target = $region40
        $region39: #{tpu_custom_call.1} parent=35 // pred_region
          %s273 = sand.u32 %s42, 1
          %s274 = scalar_lea.sflag [#allocation7], %s273
          %s275 = sand.u32 %s42, 1
          %s276 = smul.addr %s275, 8
          %s277 = scalar_lea.vmem [#allocation6], %s276
          %279 = vsyncadd %s274, 0
          %s280 = smul.addr %s27, 8
          %s281 = scalar_lea.hbm %s0, %s280
          %s283 = sshll.u32 %s281, 4
          %s284 = int_to_ptr.hbm [resolvable:$true] %s283
          %s285 = sshll.u32 %s277, 4
          %s286 = int_to_ptr.vmem [resolvable:$true] %s285
          %288 = dma.hbm_to_vmem [thread:$0]  %s284, 128, %s286, %s274
        $region40: #{tpu_custom_call.1} parent=35 // pred_fallthru
          _
      $region36: #{tpu_custom_call.1} parent=5 // pred_fallthru
        _
      %p289 = scmp.le.s32.totalorder 1, %s20
      %p290 = scmp.lt.s32.totalorder %s20, 3
      %p291 = pnand %p289, %p290
      %p292 = pneg %p291
      // Predicated region
      $region41: #{tpu_custom_call.1} parent=5 // pred_check
        _
      $region42: #{tpu_custom_call.1} parent=5 // pred_check_branch
        %294 = sbr.rel (%p291) target = $region44
      $region43: #{tpu_custom_call.1} parent=5 // pred_region
        %s295 = ssub.s32 %s20, 1
        %s296 = sand.u32 %s45, 1
        %s297 = scalar_lea.sflag [#allocation7], %s296
        %s298 = sand.u32 %s45, 1
        %s299 = smul.addr %s298, 8
        %s300 = scalar_lea.vmem [#allocation6], %s299
        // Predicated region
        $region45: #{tpu_custom_call.1} parent=43 // pred_check
          %p301 = pneg %p58
        $region46: #{tpu_custom_call.1} parent=43 // pred_check_branch
          %303 = sbr.rel (%p301) target = $region48
        $region47: #{tpu_custom_call.1} parent=43 // pred_region
          %305 = dma.done %s297, 128
        $region48: #{tpu_custom_call.1} parent=43 // pred_fallthru
          _
        // Predicated region
        $region49: #{tpu_custom_call.1} parent=43 // pred_check
          %p306 = pneg %p79
        $region50: #{tpu_custom_call.1} parent=43 // pred_check_branch
          %308 = sbr.rel (%p306) target = $region52
        $region51: #{tpu_custom_call.1} parent=43 // pred_region
          %310 = dma.done [#allocation10], 16
        $region52: #{tpu_custom_call.1} parent=43 // pred_fallthru
          _
        // Predicated region
        $region53: #{tpu_custom_call.1} parent=43 // pred_check
          %p311 = pneg %p126
        $region54: #{tpu_custom_call.1} parent=43 // pred_check_branch
          %313 = sbr.rel (%p311) target = $region56
        $region55: #{tpu_custom_call.1} parent=43 // pred_region
          %315 = dma.done [#allocation10], 256
        $region56: #{tpu_custom_call.1} parent=43 // pred_fallthru
          _
        // Predicated region
        $region57: #{tpu_custom_call.1} parent=43 // pred_check
          %p316 = pneg %p152
        $region58: #{tpu_custom_call.1} parent=43 // pred_check_branch
          %318 = sbr.rel (%p316) target = $region60
        $region59: #{tpu_custom_call.1} parent=43 // pred_region
          %320 = dma.done [#allocation13], 256
        $region60: #{tpu_custom_call.1} parent=43 // pred_fallthru
          _
        %s321 = sand.u32 %s45, 1
        %s322 = scalar_lea.sflag [#allocation7], %s321
        %s323 = sand.u32 %s45, 1
        %s324 = smul.addr %s323, 8
        %s325 = scalar_lea.vmem [#allocation6], %s324
        %p326 = pneg %p58
        %p327 = pneg %p55
        %p328 = pneg %p79
        %p329 = pneg %p76
        %p330 = pneg %p100
        %p331 = pneg %p97
        %p332 = pneg %p126
        %p333 = pneg %p123
        %p334 = pneg %p152
        %p335 = pneg %p149
        %p336 = pneg %p173
        %p337 = pneg %p170
        %p338 = pneg %p199
        %p339 = pneg %p196
        %s340 = sand.u32 %s186, 1
        %s341 = scalar_lea.sflag [#allocation8], %s340
        %s342 = sand.u32 %s186, 1
        %s343 = smul.addr %s342, 8
        %s344 = scalar_lea.vmem [#allocation14], %s343
        %p346 = scmp.eq.s32.totalorder %s30, 0
        // Predicated region
        $region61: #{tpu_custom_call.1} parent=43 // pred_check
          %p347 = pneg %p346
        $region62: #{tpu_custom_call.1} parent=43 // pred_check_branch
          %349 = sbr.rel (%p347) target = $region64
        $region63: #{tpu_custom_call.1} parent=43 // pred_region
          %v350 = vld [vmem:[%s300] sm:$0xff]
          %v351 = vld [vmem:[#allocation9] sm:$0x1]
          %v352 = vld [vmem:[%s2] sm:$0x1]
          %vm353 = vcmask 261120
          %v354 = vsel %vm353, %v350, 0.0
          %355 = vadd.xlane.f32.xlu0 %v354
          %v356 = vpop.xlane.xlu0 %355
          %v357 = vrcp.pop 32.0
          %v358 = vmul.f32 32.0, %v357
          %v359 = vsub.f32 1.0, %v358
          %v360 = vmul.f32 %v357, %v359
          %v361 = vadd.f32 %v357, %v360
          %vm362 = vweird.f32 %v357
          %v363 = vsel %vm362, %v357, %v361
          %v364 = vmul.f32 %v356, %v363
          %v365 = vsub.f32 %v350, %v364
          %v366 = vmul.f32 %v365, %v365
          %v367 = vsel %vm353, %v366, 0.0
          %368 = vadd.xlane.f32.xlu0 %v367
          %v369 = vpop.xlane.xlu0 %368
          %v370 = vmul.f32 %v369, %v363
          %v371 = vadd.f32 %v370, 1e-05
          %v372 = vrsqrt.pop %v371
          %v373 = vmul.f32 %v372, %v371
          %v374 = vmul.f32 %v373, %v372
          %v375 = vmul.f32 0.5, %v374
          %v376 = vsub.f32 1.5, %v375
          %v377 = vmul.f32 %v372, %v376
          %vm378 = vweird.f32 %v371
          %vm379 = vweird.f32 %v372
          %vm380 = vmor %vm378, %vm379
          %v381 = vsel %vm380, %v372, %v377
          %v382 = vmul.f32 %v365, %v381
          %v384 = vperm.slane %v351, 0
          %v386 = vmul.f32 %v382, %v384
          %v388 = vperm.slane %v352, 0
          %v390 = vadd.f32 %v386, %v388
          %v391 = vpack.c.bf16 %v390, %v390
          %vm392 = vcmask 257024
          %393 = vst.msk [vmem:[#allocation2] sm:$0xf] %vm392, %v391
          %v394 = vld [vmem:[%s5] sm:$0x1]
          %v396 = vperm.slane %v394, 0
          %v398 = vadd.f32 %v350, %v396
          %399 = vst.msk [vmem:[#allocation5] sm:$0xff] %vm353, %v398
        $region64: #{tpu_custom_call.1} parent=43 // pred_fallthru
          _
        %v400 = vld [vmem:[#allocation2] sm:$0xf]
        %v401 = vld [vmem:[#allocation11] sm:$0xf]
        %v402 = vld [vmem:[#allocation11 + $0x4] sm:$0xf]
        %v403 = vld [vmem:[#allocation11 + $0x8] sm:$0xf]
        %v404 = vld [vmem:[#allocation11 + $0xc] sm:$0xf]
        %v409 = vunpack.c.l.b16 %v401
        %v410 = vunpack.c.l.b16 %v402
        %v411 = vunpack.c.l.b16 %v403
        %v412 = vunpack.c.l.b16 %v404
        %v413 = vpack.c.b16 %v410, %v409
        %v414 = vpack.c.b16 %v412, %v411
        %vm417 = vcmask 261120
        %v419 = vsel %vm417, %v400, 0
        %421 = vmatpush.bf16.msra.mxu0 0
        %422 = vmatpush.bf16.msra.mxu0 0
        %423 = vmatpush.bf16.msra.mxu0 0
        %424 = vmatpush.bf16.msra.mxu0 0
        %425 = vmatpush.bf16.msra.mxu0 0
        %426 = vmatpush.bf16.msra.mxu0 0
        %427 = vmatpush.bf16.msra.mxu0 %v414
        %428 = vmatpush.bf16.msra.mxu0 %v413
        %429 = vmatmul.bf16.gmra.mxu0 %v419
        %v430 = vpop.f32.mrf.mxu0
        %v431 = vadd.f32 0.0, %v430
        %v432 = vpop.f32.mrf.mxu0
        %433 = vdwg.mxu0
        %v434 = vpack.c.bf16 %v431, %v431
        %vm435 = vcmask 781312
        %436 = vst.msk [vmem:[#allocation3] sm:$0xf] %vm435, %v434
        %v437 = vld [vmem:[#allocation3] sm:$0xf]
        %v439 = vunpack.c.l.b16 %v437
        %v440 = vpack.c.b16 %v439, %v439
        %441 = vrot.lane.b32.xlu0 %v440, 96
        %v442 = vpop.permute.xlu0 %441
        %vm443 = vcmask 64512
        %v445 = vsel %vm443, %v437, 0
        %v448 = vsel %vm443, %v442, 0
        %450 = vmatpush.bf16.xpose.msra.mxu0 0
        %451 = vmatpush.bf16.xpose.msra.mxu0 0
        %452 = vmatpush.bf16.xpose.msra.mxu0 0
        %453 = vmatpush.bf16.xpose.msra.mxu0 0
        %454 = vmatpush.bf16.xpose.msra.mxu0 0
        %455 = vmatpush.bf16.xpose.msra.mxu0 0
        %456 = vmatpush.bf16.xpose.msra.mxu0 0
        %457 = vmatpush.bf16.xpose.msra.mxu0 %v448
        %458 = vmatmul.bf16.gmra.mxu0 %v445
        %v459 = vpop.f32.mrf.mxu0
        %v460 = vadd.f32 0.0, %v459
        %v461 = vpop.f32.mrf.mxu0
        %462 = vdwg.mxu0
        %v463 = vsel %vm443, %v460, -inf
        %464 = vmax.xlane.f32.xlu0 %v463
        %v465 = vpop.xlane.xlu0 %464
        %v466 = vsub.f32 %v460, %v465
        %v467 = vmul.f32 %v466, 1.442695
        %v468 = vpow.pop %v467
        %v469 = vsel %vm443, %v468, 0.0
        %470 = vadd.xlane.f32.xlu0 %v469
        %v471 = vpop.xlane.xlu0 %470
        %v472 = vrcp.pop %v471
        %v473 = vmul.f32 %v468, %v472
        %v474 = vpack.c.bf16 %v473, %v473
        %475 = vrot.lane.b32.xlu0 %v440, 64
        %v476 = vpop.permute.xlu0 %475
        %v478 = vsel %vm443, %v474, 0
        %vm480 = vcmask 1043456
        %v482 = vsel %vm480, %v476, 0
        %484 = vmatpush.bf16.msra.mxu0 0
        %485 = vmatpush.bf16.msra.mxu0 0
        %486 = vmatpush.bf16.msra.mxu0 0
        %487 = vmatpush.bf16.msra.mxu0 0
        %488 = vmatpush.bf16.msra.mxu0 0
        %489 = vmatpush.bf16.msra.mxu0 0
        %490 = vmatpush.bf16.msra.mxu0 0
        %491 = vmatpush.bf16.msra.mxu0 %v482
        %492 = vmatmul.bf16.gmra.mxu0 %v478
        %v493 = vpop.f32.mrf.mxu0
        %v494 = vadd.f32 0.0, %v493
        %v495 = vpop.f32.mrf.mxu0
        %496 = vdwg.mxu0
        %v497 = vpack.c.bf16 %v494, %v494
        %vm498 = vcmask 60416
        %499 = vst.msk [vmem:[#allocation4] sm:$0xf] %vm498, %v497
        %v500 = vld [vmem:[#allocation3] sm:$0xf]
        %v502 = vunpack.c.l.b16 %v500
        %v503 = vpack.c.b16 %v502, %v502
        %504 = vrot.lane.b32.xlu0 %v503, 120
        %v505 = vpop.permute.xlu0 %504
        %506 = vrot.lane.b32.xlu0 %v503, 88
        %v507 = vpop.permute.xlu0 %506
        %v509 = vsel %vm443, %v505, 0
        %v512 = vsel %vm443, %v507, 0
        %514 = vmatpush.bf16.xpose.msra.mxu0 0
        %515 = vmatpush.bf16.xpose.msra.mxu0 0
        %516 = vmatpush.bf16.xpose.msra.mxu0 0
        %517 = vmatpush.bf16.xpose.msra.mxu0 0
        %518 = vmatpush.bf16.xpose.msra.mxu0 0
        %519 = vmatpush.bf16.xpose.msra.mxu0 0
        %520 = vmatpush.bf16.xpose.msra.mxu0 0
        %521 = vmatpush.bf16.xpose.msra.mxu0 %v512
        %522 = vmatmul.bf16.gmra.mxu0 %v509
        %v523 = vpop.f32.mrf.mxu0
        %v524 = vadd.f32 0.0, %v523
        %v525 = vpop.f32.mrf.mxu0
        %526 = vdwg.mxu0
        %v527 = vsel %vm443, %v524, -inf
        %528 = vmax.xlane.f32.xlu0 %v527
        %v529 = vpop.xlane.xlu0 %528
        %v530 = vsub.f32 %v524, %v529
        %v531 = vmul.f32 %v530, 1.442695
        %v532 = vpow.pop %v531
        %v533 = vsel %vm443, %v532, 0.0
        %534 = vadd.xlane.f32.xlu0 %v533
        %v535 = vpop.xlane.xlu0 %534
        %v536 = vrcp.pop %v535
        %v537 = vmul.f32 %v532, %v536
        %v538 = vpack.c.bf16 %v537, %v537
        %539 = vrot.lane.b32.xlu0 %v503, 56
        %v540 = vpop.permute.xlu0 %539
        %v542 = vsel %vm443, %v538, 0
        %v545 = vsel %vm480, %v540, 0
        %547 = vmatpush.bf16.msra.mxu0 0
        %548 = vmatpush.bf16.msra.mxu0 0
        %549 = vmatpush.bf16.msra.mxu0 0
        %550 = vmatpush.bf16.msra.mxu0 0
        %551 = vmatpush.bf16.msra.mxu0 0
        %552 = vmatpush.bf16.msra.mxu0 0
        %553 = vmatpush.bf16.msra.mxu0 0
        %554 = vmatpush.bf16.msra.mxu0 %v545
        %555 = vmatmul.bf16.gmra.mxu0 %v542
        %v556 = vpop.f32.mrf.mxu0
        %v557 = vadd.f32 0.0, %v556
        %v558 = vpop.f32.mrf.mxu0
        %559 = vdwg.mxu0
        %v560 = vpack.c.bf16 %v557, %v557
        %562 = vrot.lane.b32.xlu0 %v560, 8
        %v563 = vpop.permute.xlu0 %562
        %vm565 = vcmask 126016
        %566 = vst.msk [vmem:[#allocation4] sm:$0xf] %vm565, %v563
        %v567 = vld [vmem:[#allocation3] sm:$0xf]
        %v569 = vunpack.c.l.b16 %v567
        %v570 = vpack.c.b16 %v569, %v569
        %571 = vrot.lane.b32.xlu0 %v570, 112
        %v572 = vpop.permute.xlu0 %571
        %573 = vrot.lane.b32.xlu0 %v570, 80
        %v574 = vpop.permute.xlu0 %573
        %v576 = vsel %vm443, %v572, 0
        %v579 = vsel %vm443, %v574, 0
        %581 = vmatpush.bf16.xpose.msra.mxu0 0
        %582 = vmatpush.bf16.xpose.msra.mxu0 0
        %583 = vmatpush.bf16.xpose.msra.mxu0 0
        %584 = vmatpush.bf16.xpose.msra.mxu0 0
        %585 = vmatpush.bf16.xpose.msra.mxu0 0
        %586 = vmatpush.bf16.xpose.msra.mxu0 0
        %587 = vmatpush.bf16.xpose.msra.mxu0 0
        %588 = vmatpush.bf16.xpose.msra.mxu0 %v579
        %589 = vmatmul.bf16.gmra.mxu0 %v576
        %v590 = vpop.f32.mrf.mxu0
        %v591 = vadd.f32 0.0, %v590
        %v592 = vpop.f32.mrf.mxu0
        %593 = vdwg.mxu0
        %v594 = vsel %vm443, %v591, -inf
        %595 = vmax.xlane.f32.xlu0 %v594
        %v596 = vpop.xlane.xlu0 %595
        %v597 = vsub.f32 %v591, %v596
        %v598 = vmul.f32 %v597, 1.442695
        %v599 = vpow.pop %v598
        %v600 = vsel %vm443, %v599, 0.0
        %601 = vadd.xlane.f32.xlu0 %v600
        %v602 = vpop.xlane.xlu0 %601
        %v603 = vrcp.pop %v602
        %v604 = vmul.f32 %v599, %v603
        %v605 = vpack.c.bf16 %v604, %v604
        %606 = vrot.lane.b32.xlu0 %v570, 48
        %v607 = vpop.permute.xlu0 %606
        %v609 = vsel %vm443, %v605, 0
        %v612 = vsel %vm480, %v607, 0
        %614 = vmatpush.bf16.msra.mxu0 0
        %615 = vmatpush.bf16.msra.mxu0 0
        %616 = vmatpush.bf16.msra.mxu0 0
        %617 = vmatpush.bf16.msra.mxu0 0
        %618 = vmatpush.bf16.msra.mxu0 0
        %619 = vmatpush.bf16.msra.mxu0 0
        %620 = vmatpush.bf16.msra.mxu0 0
        %621 = vmatpush.bf16.msra.mxu0 %v612
        %622 = vmatmul.bf16.gmra.mxu0 %v609
        %v623 = vpop.f32.mrf.mxu0
        %v624 = vadd.f32 0.0, %v623
        %v625 = vpop.f32.mrf.mxu0
        %626 = vdwg.mxu0
        %v627 = vpack.c.bf16 %v624, %v624
        %629 = vrot.lane.b32.xlu0 %v627, 16
        %v630 = vpop.permute.xlu0 %629
        %vm632 = vcmask 191616
        %633 = vst.msk [vmem:[#allocation4] sm:$0xf] %vm632, %v630
        %v634 = vld [vmem:[#allocation3] sm:$0xf]
        %v636 = vunpack.c.l.b16 %v634
        %v637 = vpack.c.b16 %v636, %v636
        %638 = vrot.lane.b32.xlu0 %v637, 104
        %v639 = vpop.permute.xlu0 %638
        %640 = vrot.lane.b32.xlu0 %v637, 72
        %v641 = vpop.permute.xlu0 %640
        %v643 = vsel %vm443, %v639, 0
        %v646 = vsel %vm443, %v641, 0
        %648 = vmatpush.bf16.xpose.msra.mxu0 0
        %649 = vmatpush.bf16.xpose.msra.mxu0 0
        %650 = vmatpush.bf16.xpose.msra.mxu0 0
        %651 = vmatpush.bf16.xpose.msra.mxu0 0
        %652 = vmatpush.bf16.xpose.msra.mxu0 0
        %653 = vmatpush.bf16.xpose.msra.mxu0 0
        %654 = vmatpush.bf16.xpose.msra.mxu0 0
        %655 = vmatpush.bf16.xpose.msra.mxu0 %v646
        %656 = vmatmul.bf16.gmra.mxu0 %v643
        %v657 = vpop.f32.mrf.mxu0
        %v658 = vadd.f32 0.0, %v657
        %v659 = vpop.f32.mrf.mxu0
        %660 = vdwg.mxu0
        %v661 = vsel %vm443, %v658, -inf
        %662 = vmax.xlane.f32.xlu0 %v661
        %v663 = vpop.xlane.xlu0 %662
        %v664 = vsub.f32 %v658, %v663
        %v665 = vmul.f32 %v664, 1.442695
        %v666 = vpow.pop %v665
        %v667 = vsel %vm443, %v666, 0.0
        %668 = vadd.xlane.f32.xlu0 %v667
        %v669 = vpop.xlane.xlu0 %668
        %v670 = vrcp.pop %v669
        %v671 = vmul.f32 %v666, %v670
        %v672 = vpack.c.bf16 %v671, %v671
        %673 = vrot.lane.b32.xlu0 %v637, 40
        %v674 = vpop.permute.xlu0 %673
        %v676 = vsel %vm443, %v672, 0
        %v679 = vsel %vm480, %v674, 0
        %681 = vmatpush.bf16.msra.mxu0 0
        %682 = vmatpush.bf16.msra.mxu0 0
        %683 = vmatpush.bf16.msra.mxu0 0
        %684 = vmatpush.bf16.msra.mxu0 0
        %685 = vmatpush.bf16.msra.mxu0 0
        %686 = vmatpush.bf16.msra.mxu0 0
        %687 = vmatpush.bf16.msra.mxu0 0
        %688 = vmatpush.bf16.msra.mxu0 %v679
        %689 = vmatmul.bf16.gmra.mxu0 %v676
        %v690 = vpop.f32.mrf.mxu0
        %v691 = vadd.f32 0.0, %v690
        %v692 = vpop.f32.mrf.mxu0
        %693 = vdwg.mxu0
        %v694 = vpack.c.bf16 %v691, %v691
        %696 = vrot.lane.b32.xlu0 %v694, 24
        %v697 = vpop.permute.xlu0 %696
        %vm699 = vcmask 257216
        %700 = vst.msk [vmem:[#allocation4] sm:$0xf] %vm699, %v697
        %v701 = vld [vmem:[#allocation5] sm:$0xff]
        %v702 = vld [vmem:[#allocation4] sm:$0xf]
        %v703 = vld [vmem:[#allocation12] sm:$0xf]
        %v704 = vld [vmem:[#allocation12 + $0x4] sm:$0xf]
        %v705 = vld [vmem:[#allocation12 + $0x8] sm:$0xf]
        %v706 = vld [vmem:[#allocation12 + $0xc] sm:$0xf]
        %v711 = vunpack.c.l.b16 %v703
        %v712 = vunpack.c.l.b16 %v704
        %v713 = vunpack.c.l.b16 %v705
        %v714 = vunpack.c.l.b16 %v706
        %v715 = vpack.c.b16 %v712, %v711
        %v716 = vpack.c.b16 %v714, %v713
        %v720 = vsel %vm417, %v702, 0
        %722 = vmatpush.bf16.msra.mxu0 0
        %723 = vmatpush.bf16.msra.mxu0 0
        %724 = vmatpush.bf16.msra.mxu0 0
        %725 = vmatpush.bf16.msra.mxu0 0
        %726 = vmatpush.bf16.msra.mxu0 0
        %727 = vmatpush.bf16.msra.mxu0 0
        %728 = vmatpush.bf16.msra.mxu0 %v716
        %729 = vmatpush.bf16.msra.mxu0 %v715
        %730 = vmatmul.bf16.gmra.mxu0 %v720
        %v731 = vpop.f32.mrf.mxu0
        %v732 = vadd.f32 0.0, %v731
        %v733 = vpop.f32.mrf.mxu0
        %734 = vdwg.mxu0
        %v735 = vadd.f32 %v701, %v732
        %736 = vst.msk [vmem:[#allocation5] sm:$0xff] %vm417, %v735
        // Predicated region
        $region65: #{tpu_custom_call.1} parent=43 // pred_check
          %p737 = pneg %p346
        $region66: #{tpu_custom_call.1} parent=43 // pred_check_branch
          %739 = sbr.rel (%p737) target = $region68
        $region67: #{tpu_custom_call.1} parent=43 // pred_region
          %v740 = vld [vmem:[#allocation5] sm:$0xff]
          %741 = vst.msk [vmem:[%s344] sm:$0xff] %vm417, %v740
        $region68: #{tpu_custom_call.1} parent=43 // pred_fallthru
          _
        %s742 = sand.u32 %s186, 1
        %s743 = scalar_lea.sflag [#allocation8], %s742
        %s744 = sand.u32 %s186, 1
        %s745 = smul.addr %s744, 8
        %s746 = scalar_lea.vmem [#allocation14], %s745
        // Predicated region
        $region69: #{tpu_custom_call.1} parent=43 // pred_check
          %p747 = pneg %p196
        $region70: #{tpu_custom_call.1} parent=43 // pred_check_branch
          %749 = sbr.rel (%p747) target = $region72
        $region71: #{tpu_custom_call.1} parent=43 // pred_region
          %751 = vsyncadd %s743, 0
          %s752 = smul.addr %s29, 8
          %s753 = scalar_lea.hbm %s6, %s752
          %s755 = sshll.u32 %s746, 4
          %s756 = int_to_ptr.vmem [resolvable:$true] %s755
          %s757 = sshll.u32 %s753, 4
          %s758 = int_to_ptr.hbm [resolvable:$true] %s757
          %760 = dma.vmem_to_hbm [thread:$0]  %s756, 128, %s758, %s743
        $region72: #{tpu_custom_call.1} parent=43 // pred_fallthru
          _
      $region44: #{tpu_custom_call.1} parent=5 // pred_fallthru
        _
      %p761 = scmp.le.s32.totalorder 2, %s20
      // Predicated region
      $region73: #{tpu_custom_call.1} parent=5 // pred_check
        %p762 = pneg %p761
      $region74: #{tpu_custom_call.1} parent=5 // pred_check_branch
        %764 = sbr.rel (%p762) target = $region76
      $region75: #{tpu_custom_call.1} parent=5 // pred_region
        %s765 = ssub.s32 %s20, 2
        // Predicated region
        $region77: #{tpu_custom_call.1} parent=75 // pred_check
          %p766 = pneg %p202
        $region78: #{tpu_custom_call.1} parent=75 // pred_check_branch
          %768 = sbr.rel (%p766) target = $region80
        $region79: #{tpu_custom_call.1} parent=75 // pred_region
          %s769 = sand.u32 %s187, 1
          %s770 = scalar_lea.sflag [#allocation8], %s769
          %s771 = sand.u32 %s187, 1
          %s772 = smul.addr %s771, 8
          %s773 = scalar_lea.vmem [#allocation14], %s772
          %775 = dma.done %s770, 128
        $region80: #{tpu_custom_call.1} parent=75 // pred_fallthru
          _
      $region76: #{tpu_custom_call.1} parent=5 // pred_fallthru
        _
    $region6: #{tpu_custom_call.1} parent=1 // loop_footer
      %s24 = sadd.s32 1, %s20
    $region7: #{tpu_custom_call.1} parent=1 // loop_footer_branch
      %19 = sbr.rel target = $region3
    $region8: #{tpu_custom_call.1} parent=1 // loop_exit
      _
    %776 = vsyncpa [#allocation7], 1
    %s777 = scalar_lea.sflag [#allocation7], 1
    %778 = vsyncpa %s777, 1
    %779 = vsyncpa [#allocation10], 1
    %780 = vsyncpa [#allocation13], 1
    %781 = vsyncpa [#allocation8], 1
    %s782 = scalar_lea.sflag [#allocation8], 1
    %783 = vsyncpa %s782, 1

</llo_original>
